<compile_context>
chip_gen: v7x
topology: tpu7x:2x2x1
jax: 0.10.0
libtpu: 0.0.40
codegen_flags: <defaults>
</compile_context>

<pallas_src>
import jax
import jax.numpy as jnp
from jax.experimental import pallas as pl
from jax.experimental.pallas import tpu as pltpu


def _round_up(x, m):
    return ((x + m - 1) // m) * m


def _discriminator_kernel(x_ref, w1_ref, b1_ref, w2_ref, b2_ref, w3_ref, b3_ref,
                          o_ref):
    x = x_ref[...]
    if x.dtype != jnp.bfloat16:          # static (trace-time) dtype check
        x = x.astype(jnp.bfloat16)

    # Linear(input_dim, 512) + LeakyReLU(0.2): bf16 MXU, f32 accumulation.
    h1 = jnp.dot(x, w1_ref[...], preferred_element_type=jnp.float32) + b1_ref[...]
    h1 = jnp.maximum(h1, 0.2 * h1)

    # Linear(512, 256) + LeakyReLU(0.2)
    h2 = jnp.dot(h1.astype(jnp.bfloat16), w2_ref[...],
                 preferred_element_type=jnp.float32) + b2_ref[...]
    h2 = jnp.maximum(h2, 0.2 * h2)

    # Linear(256, 1): VPU multiply + lane reduction (keeps the tiny final
    # layer off the MXU and produces the (TB, 1) output directly, f32).
    logits = jnp.sum(h2 * w3_ref[...], axis=-1, keepdims=True) + b3_ref[...]

    # Sigmoid on (TB, 1) only.
    o_ref[...] = (1.0 / (1.0 + jnp.exp(-logits))).astype(o_ref.dtype)


def discriminator_forward(x, params, *, block_b=2048):
    """x: (B, input_dim) float32 or bfloat16.  Returns (B, 1) float32."""
    w1, b1, w2, b2, w3, b3 = params
    B, D = x.shape
    H1 = w1.shape[1]
    H2 = w2.shape[1]

    # bf16 weights for the MXU; biases and the final-layer row stay f32
    # (they join the f32 accumulator / VPU path).
    w1b = w1.astype(jnp.bfloat16)
    w2b = w2.astype(jnp.bfloat16)
    b1r = b1.reshape(1, H1).astype(jnp.float32)
    b2r = b2.reshape(1, H2).astype(jnp.float32)
    w3r = w3.reshape(1, H2).astype(jnp.float32)   # row vector for mul+reduce
    b3r = b3.reshape(1, 1).astype(jnp.float32)

    x_bytes = 2 if x.dtype == jnp.bfloat16 else 4

    # Resident (constant index_map) operands, double-buffered by the runtime.
    resident = 2 * (D * H1 * 2 + H1 * H2 * 2 + (H1 + 2 * H2 + 1) * 4)
    # Per-batch-row VMEM cost of one grid step: double-buffered x / out tiles,
    # f32 h1/h2 intermediates, bf16 cast temporaries.
    per_row = 2 * D * x_bytes + 2 * 4 + (H1 + H2) * 4 + (D + H1) * 2

    # Batch tile: >= 4 grid steps (v7x megacore), capped by block_b and VMEM.
    budget = 40 * 1024 * 1024
    tb_steps = _round_up((B + 3) // 4, 8)
    tb_vmem = max(8, ((budget - resident) // max(per_row, 1)) // 8 * 8)
    TB = max(8, min(block_b, tb_steps, tb_vmem))

    Bp = _round_up(B, TB)
    if Bp != B:
        x = jnp.pad(x, ((0, Bp - B), (0, 0)))
    grid = (Bp // TB,)

    vmem_est = resident + TB * per_row
    vmem_limit = int(min(48 * 1024 * 1024,
                         max(32 * 1024 * 1024, int(vmem_est * 1.5))))

    flops = 2 * Bp * (D * H1 + H1 * H2 + H2)
    bytes_accessed = (Bp * D * x_bytes + Bp * 4
                      + w1b.size * 2 + w2b.size * 2 + w3r.size * 4
                      + b1r.size * 4 + b2r.size * 4 + b3r.size * 4)
    transcendentals = Bp  # one exp per output row

    out = pl.pallas_call(
        _discriminator_kernel,
        out_shape=jax.ShapeDtypeStruct((Bp, 1), jnp.float32),
        grid_spec=pltpu.PrefetchScalarGridSpec(
            num_scalar_prefetch=0,
            grid=grid,
            in_specs=[
                pl.BlockSpec((TB, D), lambda i: (i, 0)),     # x tile
                pl.BlockSpec((D, H1), lambda i: (0, 0)),     # w1 (VMEM-resident)
                pl.BlockSpec((1, H1), lambda i: (0, 0)),     # b1
                pl.BlockSpec((H1, H2), lambda i: (0, 0)),    # w2
                pl.BlockSpec((1, H2), lambda i: (0, 0)),     # b2
                pl.BlockSpec((1, H2), lambda i: (0, 0)),     # w3 row
                pl.BlockSpec((1, 1), lambda i: (0, 0)),      # b3
            ],
            out_specs=pl.BlockSpec((TB, 1), lambda i: (i, 0)),
        ),
        compiler_params=pltpu.CompilerParams(
            dimension_semantics=("parallel",),
            vmem_limit_bytes=vmem_limit,
        ),
        cost_estimate=pl.CostEstimate(
            flops=int(flops),
            bytes_accessed=int(bytes_accessed),
            transcendentals=int(transcendentals),
        ),
    )(x, w1b, b1r, w2b, b2r, w3r, b3r)

    return out[:B]


def init_params(key, input_dim):
    """Deterministic synthetic init matching nn.Linear shapes.

    PyTorch weight is (out, in); we store the transpose (in, out) so the
    kernel computes x @ W.  Biases stored as (1, out) rows.
    """
    dims = [(input_dim, 512), (512, 256), (256, 1)]
    params = []
    for (fan_in, fan_out) in dims:
        key, kw, kb = jax.random.split(key, 3)
        bound = 1.0 / (fan_in ** 0.5)  # PyTorch default uniform bound
        w = jax.random.uniform(kw, (fan_in, fan_out), jnp.float32, -bound, bound)
        b = jax.random.uniform(kb, (1, fan_out), jnp.float32, -bound, bound)
        params += [w, b]
    return tuple(params)


def _reference_forward(x, params):
    w1, b1, w2, b2, w3, b3 = params
    h = x @ w1 + b1
    h = jnp.where(h > 0, h, 0.2 * h)
    h = h @ w2 + b2
    h = jnp.where(h > 0, h, 0.2 * h)
    return jax.nn.sigmoid(h @ w3 + b3)


if __name__ == "__main__":
    key = jax.random.PRNGKey(0)
    batch, input_dim, hidden_dim = 20, 128, 32  # hidden_dim unused by the module

    kx, kp = jax.random.split(key)
    x = jax.random.normal(kx, (batch, input_dim), jnp.float32)
    params = init_params(kp, input_dim)

    # batch=20 -> TB=8, Bp=24, grid=(3,): exercises batch tiling, resident
    # weights, and the non-divisible (padded) batch path.
    fwd = jax.jit(discriminator_forward)
    out = jax.block_until_ready(fwd(x, params))

    ref = _reference_forward(x, params)
    assert out.shape == (batch, 1), out.shape
    # bf16 matmul operands vs f32 reference => relaxed tolerance.
    assert jnp.allclose(out, ref, atol=3e-2, rtol=0), (
        float(jnp.max(jnp.abs(out - ref))))
    print("KERNEL_OK")
</pallas_src>

<mosaic_0001>
module attributes {stable_mosaic.version = 11 : i64} {
  func.func @_discriminator_kernel(%arg0: i32, %arg1: memref<8x128xf32, #tpu.memory_space<vmem>>, %arg2: memref<128x512xbf16, #tpu.memory_space<vmem>>, %arg3: memref<1x512xf32, #tpu.memory_space<vmem>>, %arg4: memref<512x256xbf16, #tpu.memory_space<vmem>>, %arg5: memref<1x256xf32, #tpu.memory_space<vmem>>, %arg6: memref<1x256xf32, #tpu.memory_space<vmem>>, %arg7: memref<1x1xf32, #tpu.memory_space<vmem>>, %arg8: memref<8x1xf32, #tpu.memory_space<vmem>>) attributes {dimension_semantics = [#tpu.dimension_semantics<parallel>], iteration_bounds = array<i64: 3>, scalar_prefetch = 0 : i64, scratch_operands = 0 : i64, tpu.core_type = #tpu.core_type<tc>, window_params = [{transform_indices = @transform_0, window_bounds = array<i64: 8, 128>}, {pipeline_mode = #tpu.pipeline_mode<synchronous>, transform_indices = @transform_1, window_bounds = array<i64: 128, 512>}, {pipeline_mode = #tpu.pipeline_mode<synchronous>, transform_indices = @transform_2, window_bounds = array<i64: 1, 512>}, {pipeline_mode = #tpu.pipeline_mode<synchronous>, transform_indices = @transform_3, window_bounds = array<i64: 512, 256>}, {pipeline_mode = #tpu.pipeline_mode<synchronous>, transform_indices = @transform_4, window_bounds = array<i64: 1, 256>}, {pipeline_mode = #tpu.pipeline_mode<synchronous>, transform_indices = @transform_5, window_bounds = array<i64: 1, 256>}, {pipeline_mode = #tpu.pipeline_mode<synchronous>, transform_indices = @transform_6, window_bounds = array<i64: 1, 1>}, {transform_indices = @transform_7, window_bounds = array<i64: 8, 1>}]} {
    %c0 = arith.constant 0 : index
    %c0_0 = arith.constant 0 : index
    %0 = vector.load %arg1[%c0, %c0_0] : memref<8x128xf32, #tpu.memory_space<vmem>>, vector<8x128xf32>
    %1 = arith.truncf %0 : vector<8x128xf32> to vector<8x128xbf16>
    %c0_1 = arith.constant 0 : index
    %c0_2 = arith.constant 0 : index
    %2 = vector.load %arg2[%c0_1, %c0_2] : memref<128x512xbf16, #tpu.memory_space<vmem>>, vector<128x512xbf16>
    %cst = arith.constant dense<0.000000e+00> : vector<8x512xf32>
    %3 = tpu.matmul %1, %2, %cst {dimension_numbers = #tpu.dot_dimension_numbers<[1], [0], [0], [1], [0, 0, 1, 1], [], []>} : vector<8x128xbf16>, vector<128x512xbf16>, vector<8x512xf32> -> vector<8x512xf32>
    %c0_3 = arith.constant 0 : index
    %c0_4 = arith.constant 0 : index
    %4 = vector.load %arg3[%c0_3, %c0_4] : memref<1x512xf32, #tpu.memory_space<vmem>>, vector<1x512xf32>
    %5 = vector.broadcast %4 : vector<1x512xf32> to vector<8x512xf32>
    %6 = arith.addf %3, %5 : vector<8x512xf32>
    %cst_5 = arith.constant 2.000000e-01 : f32
    %7 = vector.broadcast %cst_5 : f32 to vector<8x512xf32>
    %8 = arith.mulf %7, %6 : vector<8x512xf32>
    %9 = arith.maximumf %6, %8 : vector<8x512xf32>
    %10 = arith.truncf %9 : vector<8x512xf32> to vector<8x512xbf16>
    %c0_6 = arith.constant 0 : index
    %c0_7 = arith.constant 0 : index
    %11 = vector.load %arg4[%c0_6, %c0_7] : memref<512x256xbf16, #tpu.memory_space<vmem>>, vector<512x256xbf16>
    %cst_8 = arith.constant dense<0.000000e+00> : vector<8x256xf32>
    %12 = tpu.matmul %10, %11, %cst_8 {dimension_numbers = #tpu.dot_dimension_numbers<[1], [0], [0], [1], [0, 0, 1, 1], [], []>} : vector<8x512xbf16>, vector<512x256xbf16>, vector<8x256xf32> -> vector<8x256xf32>
    %c0_9 = arith.constant 0 : index
    %c0_10 = arith.constant 0 : index
    %13 = vector.load %arg5[%c0_9, %c0_10] : memref<1x256xf32, #tpu.memory_space<vmem>>, vector<1x256xf32>
    %14 = vector.broadcast %13 : vector<1x256xf32> to vector<8x256xf32>
    %15 = arith.addf %12, %14 : vector<8x256xf32>
    %cst_11 = arith.constant 2.000000e-01 : f32
    %16 = vector.broadcast %cst_11 : f32 to vector<8x256xf32>
    %17 = arith.mulf %16, %15 : vector<8x256xf32>
    %18 = arith.maximumf %15, %17 : vector<8x256xf32>
    %c0_12 = arith.constant 0 : index
    %c0_13 = arith.constant 0 : index
    %19 = vector.load %arg6[%c0_12, %c0_13] : memref<1x256xf32, #tpu.memory_space<vmem>>, vector<1x256xf32>
    %20 = vector.broadcast %19 : vector<1x256xf32> to vector<8x256xf32>
    %21 = arith.mulf %18, %20 : vector<8x256xf32>
    %cst_14 = arith.constant dense<0.000000e+00> : vector<8xf32>
    %22 = vector.multi_reduction <add>, %21, %cst_14 [1] : vector<8x256xf32> to vector<8xf32>
    %23 = vector.shape_cast %22 : vector<8xf32> to vector<8x1xf32>
    %c0_15 = arith.constant 0 : index
    %c0_16 = arith.constant 0 : index
    %24 = vector.load %arg7[%c0_15, %c0_16] : memref<1x1xf32, #tpu.memory_space<vmem>>, vector<1x1xf32>
    %25 = vector.broadcast %24 : vector<1x1xf32> to vector<8x1xf32>
    %26 = arith.addf %23, %25 : vector<8x1xf32>
    %cst_17 = arith.constant 0.000000e+00 : f32
    %27 = vector.broadcast %cst_17 : f32 to vector<8x1xf32>
    %28 = arith.subf %27, %26 : vector<8x1xf32>
    %29 = math.exp %28 : vector<8x1xf32>
    %cst_18 = arith.constant 1.000000e+00 : f32
    %30 = vector.broadcast %cst_18 : f32 to vector<8x1xf32>
    %31 = arith.addf %30, %29 : vector<8x1xf32>
    %cst_19 = arith.constant 1.000000e+00 : f32
    %32 = vector.broadcast %cst_19 : f32 to vector<8x1xf32>
    %33 = arith.divf %32, %31 : vector<8x1xf32>
    %c0_20 = arith.constant 0 : index
    %c0_21 = arith.constant 0 : index
    %34 = vector.load %arg8[%c0_20, %c0_21] : memref<8x1xf32, #tpu.memory_space<vmem>>, vector<8x1xf32>
    tpu.vector_store %arg8[%c0_20, %c0_21], %33 {strides = array<i32>} : memref<8x1xf32, #tpu.memory_space<vmem>>, vector<8x1xf32>,
    return
  }
  func.func @transform_0(%arg0: i32) -> (i32, i32) {
    %c0_i32 = arith.constant 0 : i32
    %c0_i32_0 = arith.constant 0 : i32
    return %arg0, %c0_i32 : i32, i32
  }
  func.func @transform_1(%arg0: i32) -> (i32, i32) {
    %c0_i32 = arith.constant 0 : i32
    %c0_i32_0 = arith.constant 0 : i32
    %c0_i32_1 = arith.constant 0 : i32
    return %c0_i32, %c0_i32_0 : i32, i32
  }
  func.func @transform_2(%arg0: i32) -> (i32, i32) {
    %c0_i32 = arith.constant 0 : i32
    %c0_i32_0 = arith.constant 0 : i32
    %c0_i32_1 = arith.constant 0 : i32
    return %c0_i32, %c0_i32_0 : i32, i32
  }
  func.func @transform_3(%arg0: i32) -> (i32, i32) {
    %c0_i32 = arith.constant 0 : i32
    %c0_i32_0 = arith.constant 0 : i32
    %c0_i32_1 = arith.constant 0 : i32
    return %c0_i32, %c0_i32_0 : i32, i32
  }
  func.func @transform_4(%arg0: i32) -> (i32, i32) {
    %c0_i32 = arith.constant 0 : i32
    %c0_i32_0 = arith.constant 0 : i32
    %c0_i32_1 = arith.constant 0 : i32
    return %c0_i32, %c0_i32_0 : i32, i32
  }
  func.func @transform_5(%arg0: i32) -> (i32, i32) {
    %c0_i32 = arith.constant 0 : i32
    %c0_i32_0 = arith.constant 0 : i32
    %c0_i32_1 = arith.constant 0 : i32
    return %c0_i32, %c0_i32_0 : i32, i32
  }
  func.func @transform_6(%arg0: i32) -> (i32, i32) {
    %c0_i32 = arith.constant 0 : i32
    %c0_i32_0 = arith.constant 0 : i32
    %c0_i32_1 = arith.constant 0 : i32
    return %c0_i32, %c0_i32_0 : i32, i32
  }
  func.func @transform_7(%arg0: i32) -> (i32, i32) {
    %c0_i32 = arith.constant 0 : i32
    %c0_i32_0 = arith.constant 0 : i32
    return %arg0, %c0_i32 : i32, i32
  }
}

</mosaic_0001>

<llo_original>
// kernel: discriminator_forward.1
$region0: #{discriminator_forward.1}
  #allocation0 [shape = 'u32[]', space=smem, size = 0x4, offset = 0x4, fixed_abs, tag = 'smem constant byte address 0x4 - core index']
  #allocation1 [shape = 'u32[144,128]{1,0:T(1,128)}', space=vmem, size = 0x12000, scoped, tag = 'internal scratch']
  #allocation2 [shape = 'f32[1,1]{1,0:T(1,128)S(1)}', space=vmem, size = 0x200, scoped, tag = 'scoped memory for discriminator_forward.1']
  %s0 = inlined_call_operand.vmem [shape: f32[24,128], index: 0, kind: input, shape index: {}]
  %s1 = inlined_call_operand.vmem [shape: bf16[128,512], index: 1, kind: input, shape index: {}]
  %s2 = inlined_call_operand.vmem [shape: f32[1,512], index: 2, kind: input, shape index: {}]
  %s3 = inlined_call_operand.vmem [shape: bf16[512,256], index: 3, kind: input, shape index: {}]
  %s4 = inlined_call_operand.vmem [shape: f32[1,256], index: 4, kind: input, shape index: {}]
  %s5 = inlined_call_operand.vmem [shape: f32[1,256], index: 5, kind: input, shape index: {}]
  %s6 = inlined_call_operand.<no memory space> [shape: f32[1,1], index: 6, kind: input, shape index: {}]
  %s7 = inlined_call_operand.vmem [shape: f32[24,1], index: 7, kind: output, shape index: {}]
  %s8 = sld [smem:[#allocation0]]
  $region61: #{discriminator_forward.1} parent=0
    _
  %s10 = ssub.s32 1, %s8
  %s11 = scalar_select 0, %s10, %s8
  %v12 = vstv %s6
  %13 = vst [vmem:[#allocation2] sm:$0x1] %v12
  loop: start=0, step=1, limit=5
  $region2: #{discriminator_forward.1} parent=0 // loop_pre_header
    _
  $region3: #{discriminator_forward.1} parent=0 // loop_header
    %s15 = sphi 0, %s19
    %p16 = scmp.ge.s32.totalorder %s15, 5
    %s25 = sphi 0, %s27
    %s28 = sphi 0, %s25
    %s29 = sphi 0, %s28
    %s45 = sphi 0, %s29
    %s49 = sphi 0, %s49
    %s51 = sphi 0, %s49
    %s52 = sphi 0, %s51
    %s66 = sphi 0, %s52
    %s70 = sphi 0, %s70
    %s72 = sphi 0, %s70
    %s73 = sphi 0, %s72
    %s87 = sphi 0, %s73
    %s91 = sphi 0, %s91
    %s93 = sphi 0, %s91
    %s94 = sphi 0, %s93
    %s108 = sphi 0, %s94
    %s112 = sphi 0, %s112
    %s114 = sphi 0, %s112
    %s115 = sphi 0, %s114
    %s129 = sphi 0, %s115
    %s133 = sphi 0, %s133
    %s135 = sphi 0, %s133
    %s136 = sphi 0, %s135
    %s150 = sphi 0, %s136
    %s154 = sphi 0, %s154
    %s156 = sphi 0, %s154
    %s157 = sphi 0, %s156
    %s171 = sphi 0, %s157
    %s177 = sphi 0, %s179
    %s180 = sphi 0, %s177
    %s181 = sphi 0, %s180
    %s197 = sphi 0, %s181
  $region4: #{discriminator_forward.1} parent=0 // loop_header_branch
    %18 = sbr.rel (%p16) target = $region8
  $region5: #{discriminator_forward.1} parent=0 // loop_body
    %s20 = ssub.s32 %s15, 1
    %s21 = ssub.s32 %s15, 2
    %s22 = sadd.s32 %s15, 1
    %s23 = ssub.s32 %s15, %s22
    %p24 = scmp.eq.s32.totalorder %s23, 0
    %s26 = sadd.s32 %s25, 1
    %s27 = scalar_select %p24, %s25, %s26
    %p30 = pneg %p24
    %p31 = scmp.eq.s32.totalorder %s15, 2
    %p32 = por %p30, %p31
    %p33 = scmp.ne.s32.totalorder %s25, %s28
    %p34 = scmp.eq.s32.totalorder %s15, 0
    %p35 = por %p33, %p34
    %p36 = scmp.ne.s32.totalorder %s25, %s28
    %p37 = scmp.eq.s32.totalorder %s20, 2
    %p38 = por %p36, %p37
    %p39 = scmp.ne.s32.totalorder %s28, %s29
    %p40 = scmp.eq.s32.totalorder %s20, 0
    %p41 = por %p39, %p40
    %p42 = scmp.ne.s32.totalorder %s28, %s29
    %p43 = scmp.eq.s32.totalorder %s21, 2
    %p44 = por %p42, %p43
    %p46 = scmp.ne.s32.totalorder %s29, %s45
    %p47 = scmp.eq.s32.totalorder %s21, 0
    %p48 = por %p46, %p47
    %s50 = sadd.s32 %s49, 1
    %p53 = scmp.eq.s32.totalorder %s15, 2
    %p54 = scmp.ne.s32.totalorder %s49, %s51
    %p55 = scmp.eq.s32.totalorder %s15, 0
    %p56 = por %p54, %p55
    %p57 = scmp.ne.s32.totalorder %s49, %s51
    %p58 = scmp.eq.s32.totalorder %s20, 2
    %p59 = por %p57, %p58
    %p60 = scmp.ne.s32.totalorder %s51, %s52
    %p61 = scmp.eq.s32.totalorder %s20, 0
    %p62 = por %p60, %p61
    %p63 = scmp.ne.s32.totalorder %s51, %s52
    %p64 = scmp.eq.s32.totalorder %s21, 2
    %p65 = por %p63, %p64
    %p67 = scmp.ne.s32.totalorder %s52, %s66
    %p68 = scmp.eq.s32.totalorder %s21, 0
    %p69 = por %p67, %p68
    %s71 = sadd.s32 %s70, 1
    %p74 = scmp.eq.s32.totalorder %s15, 2
    %p75 = scmp.ne.s32.totalorder %s70, %s72
    %p76 = scmp.eq.s32.totalorder %s15, 0
    %p77 = por %p75, %p76
    %p78 = scmp.ne.s32.totalorder %s70, %s72
    %p79 = scmp.eq.s32.totalorder %s20, 2
    %p80 = por %p78, %p79
    %p81 = scmp.ne.s32.totalorder %s72, %s73
    %p82 = scmp.eq.s32.totalorder %s20, 0
    %p83 = por %p81, %p82
    %p84 = scmp.ne.s32.totalorder %s72, %s73
    %p85 = scmp.eq.s32.totalorder %s21, 2
    %p86 = por %p84, %p85
    %p88 = scmp.ne.s32.totalorder %s73, %s87
    %p89 = scmp.eq.s32.totalorder %s21, 0
    %p90 = por %p88, %p89
    %s92 = sadd.s32 %s91, 1
    %p95 = scmp.eq.s32.totalorder %s15, 2
    %p96 = scmp.ne.s32.totalorder %s91, %s93
    %p97 = scmp.eq.s32.totalorder %s15, 0
    %p98 = por %p96, %p97
    %p99 = scmp.ne.s32.totalorder %s91, %s93
    %p100 = scmp.eq.s32.totalorder %s20, 2
    %p101 = por %p99, %p100
    %p102 = scmp.ne.s32.totalorder %s93, %s94
    %p103 = scmp.eq.s32.totalorder %s20, 0
    %p104 = por %p102, %p103
    %p105 = scmp.ne.s32.totalorder %s93, %s94
    %p106 = scmp.eq.s32.totalorder %s21, 2
    %p107 = por %p105, %p106
    %p109 = scmp.ne.s32.totalorder %s94, %s108
    %p110 = scmp.eq.s32.totalorder %s21, 0
    %p111 = por %p109, %p110
    %s113 = sadd.s32 %s112, 1
    %p116 = scmp.eq.s32.totalorder %s15, 2
    %p117 = scmp.ne.s32.totalorder %s112, %s114
    %p118 = scmp.eq.s32.totalorder %s15, 0
    %p119 = por %p117, %p118
    %p120 = scmp.ne.s32.totalorder %s112, %s114
    %p121 = scmp.eq.s32.totalorder %s20, 2
    %p122 = por %p120, %p121
    %p123 = scmp.ne.s32.totalorder %s114, %s115
    %p124 = scmp.eq.s32.totalorder %s20, 0
    %p125 = por %p123, %p124
    %p126 = scmp.ne.s32.totalorder %s114, %s115
    %p127 = scmp.eq.s32.totalorder %s21, 2
    %p128 = por %p126, %p127
    %p130 = scmp.ne.s32.totalorder %s115, %s129
    %p131 = scmp.eq.s32.totalorder %s21, 0
    %p132 = por %p130, %p131
    %s134 = sadd.s32 %s133, 1
    %p137 = scmp.eq.s32.totalorder %s15, 2
    %p138 = scmp.ne.s32.totalorder %s133, %s135
    %p139 = scmp.eq.s32.totalorder %s15, 0
    %p140 = por %p138, %p139
    %p141 = scmp.ne.s32.totalorder %s133, %s135
    %p142 = scmp.eq.s32.totalorder %s20, 2
    %p143 = por %p141, %p142
    %p144 = scmp.ne.s32.totalorder %s135, %s136
    %p145 = scmp.eq.s32.totalorder %s20, 0
    %p146 = por %p144, %p145
    %p147 = scmp.ne.s32.totalorder %s135, %s136
    %p148 = scmp.eq.s32.totalorder %s21, 2
    %p149 = por %p147, %p148
    %p151 = scmp.ne.s32.totalorder %s136, %s150
    %p152 = scmp.eq.s32.totalorder %s21, 0
    %p153 = por %p151, %p152
    %s155 = sadd.s32 %s154, 1
    %p158 = scmp.eq.s32.totalorder %s15, 2
    %p159 = scmp.ne.s32.totalorder %s154, %s156
    %p160 = scmp.eq.s32.totalorder %s15, 0
    %p161 = por %p159, %p160
    %p162 = scmp.ne.s32.totalorder %s154, %s156
    %p163 = scmp.eq.s32.totalorder %s20, 2
    %p164 = por %p162, %p163
    %p165 = scmp.ne.s32.totalorder %s156, %s157
    %p166 = scmp.eq.s32.totalorder %s20, 0
    %p167 = por %p165, %p166
    %p168 = scmp.ne.s32.totalorder %s156, %s157
    %p169 = scmp.eq.s32.totalorder %s21, 2
    %p170 = por %p168, %p169
    %p172 = scmp.ne.s32.totalorder %s157, %s171
    %p173 = scmp.eq.s32.totalorder %s21, 0
    %p174 = por %p172, %p173
    %s175 = ssub.s32 %s15, %s22
    %p176 = scmp.eq.s32.totalorder %s175, 0
    %s178 = sadd.s32 %s177, 1
    %s179 = scalar_select %p176, %s177, %s178
    %p182 = pneg %p176
    %p183 = scmp.eq.s32.totalorder %s15, 2
    %p184 = por %p182, %p183
    %p185 = scmp.ne.s32.totalorder %s177, %s180
    %p186 = scmp.eq.s32.totalorder %s15, 0
    %p187 = por %p185, %p186
    %p188 = scmp.ne.s32.totalorder %s177, %s180
    %p189 = scmp.eq.s32.totalorder %s20, 2
    %p190 = por %p188, %p189
    %p191 = scmp.ne.s32.totalorder %s180, %s181
    %p192 = scmp.eq.s32.totalorder %s20, 0
    %p193 = por %p191, %p192
    %p194 = scmp.ne.s32.totalorder %s180, %s181
    %p195 = scmp.eq.s32.totalorder %s21, 2
    %p196 = por %p194, %p195
    %p198 = scmp.ne.s32.totalorder %s181, %s197
    %p199 = scmp.eq.s32.totalorder %s21, 0
    %p200 = por %p198, %p199
    %p201 = scmp.le.s32.totalorder 1, %s15
    %p202 = scmp.lt.s32.totalorder %s15, 4
    %p203 = pnand %p201, %p202
    %p204 = pneg %p203
    // Predicated region
    $region9: #{discriminator_forward.1} parent=5 // pred_check
      _
    $region10: #{discriminator_forward.1} parent=5 // pred_check_branch
      %206 = sbr.rel (%p203) target = $region12
    $region11: #{discriminator_forward.1} parent=5 // pred_region
      %s207 = ssub.s32 %s15, 1
      // Predicated region
      $region13: #{discriminator_forward.1} parent=11 // pred_check
        %p208 = pneg %p62
      $region14: #{discriminator_forward.1} parent=11 // pred_check_branch
        %210 = sbr.rel (%p208) target = $region16
      $region15: #{discriminator_forward.1} parent=11 // pred_region
        _
      $region16: #{discriminator_forward.1} parent=11 // pred_fallthru
        _
      // Predicated region
      $region17: #{discriminator_forward.1} parent=11 // pred_check
        %p211 = pneg %p83
      $region18: #{discriminator_forward.1} parent=11 // pred_check_branch
        %213 = sbr.rel (%p211) target = $region20
      $region19: #{discriminator_forward.1} parent=11 // pred_region
        _
      $region20: #{discriminator_forward.1} parent=11 // pred_fallthru
        _
      // Predicated region
      $region21: #{discriminator_forward.1} parent=11 // pred_check
        %p214 = pneg %p104
      $region22: #{discriminator_forward.1} parent=11 // pred_check_branch
        %216 = sbr.rel (%p214) target = $region24
      $region23: #{discriminator_forward.1} parent=11 // pred_region
        _
      $region24: #{discriminator_forward.1} parent=11 // pred_fallthru
        _
      // Predicated region
      $region25: #{discriminator_forward.1} parent=11 // pred_check
        %p217 = pneg %p125
      $region26: #{discriminator_forward.1} parent=11 // pred_check_branch
        %219 = sbr.rel (%p217) target = $region28
      $region27: #{discriminator_forward.1} parent=11 // pred_region
        _
      $region28: #{discriminator_forward.1} parent=11 // pred_fallthru
        _
      // Predicated region
      $region29: #{discriminator_forward.1} parent=11 // pred_check
        %p220 = pneg %p146
      $region30: #{discriminator_forward.1} parent=11 // pred_check_branch
        %222 = sbr.rel (%p220) target = $region32
      $region31: #{discriminator_forward.1} parent=11 // pred_region
        _
      $region32: #{discriminator_forward.1} parent=11 // pred_fallthru
        _
      // Predicated region
      $region33: #{discriminator_forward.1} parent=11 // pred_check
        %p223 = pneg %p167
      $region34: #{discriminator_forward.1} parent=11 // pred_check_branch
        %225 = sbr.rel (%p223) target = $region36
      $region35: #{discriminator_forward.1} parent=11 // pred_region
        _
      $region36: #{discriminator_forward.1} parent=11 // pred_fallthru
        _
    $region12: #{discriminator_forward.1} parent=5 // pred_fallthru
      _
    %p226 = scmp.lt.s32.totalorder %s15, 3
    // Predicated region
    $region37: #{discriminator_forward.1} parent=5 // pred_check
      %p227 = pneg %p226
    $region38: #{discriminator_forward.1} parent=5 // pred_check_branch
      %229 = sbr.rel (%p227) target = $region40
    $region39: #{discriminator_forward.1} parent=5 // pred_region
      // Predicated region
      $region41: #{discriminator_forward.1} parent=39 // pred_check
        %p230 = pneg %p35
      $region42: #{discriminator_forward.1} parent=39 // pred_check_branch
        %232 = sbr.rel (%p230) target = $region44
      $region43: #{discriminator_forward.1} parent=39 // pred_region
        %p233 = scmp.lt.s32.totalorder %s15, 2
        %s234 = scalar_select %p233, %s15, 2
        %s235 = smul.addr %s234, 8
        %s236 = scalar_lea.vmem %s0, %s235
      $region44: #{discriminator_forward.1} parent=39 // pred_fallthru
        _
    $region40: #{discriminator_forward.1} parent=5 // pred_fallthru
      _
    %p237 = scmp.le.s32.totalorder 1, %s15
    %p238 = scmp.lt.s32.totalorder %s15, 4
    %p239 = pnand %p237, %p238
    %p240 = pneg %p239
    // Predicated region
    $region45: #{discriminator_forward.1} parent=5 // pred_check
      _
    $region46: #{discriminator_forward.1} parent=5 // pred_check_branch
      %242 = sbr.rel (%p239) target = $region48
    $region47: #{discriminator_forward.1} parent=5 // pred_region
      %s243 = ssub.s32 %s15, 1
      %p244 = scmp.lt.s32.totalorder %s20, 2
      %s245 = scalar_select %p244, %s20, 2
      %s246 = smul.addr %s245, 8
      %s247 = scalar_lea.vmem %s0, %s246
      %p248 = pneg %p41
      %p249 = pneg %p38
      %p250 = pneg %p62
      %p251 = pneg %p59
      %p252 = pneg %p83
      %p253 = pneg %p80
      %p254 = pneg %p104
      %p255 = pneg %p101
      %p256 = pneg %p125
      %p257 = pneg %p122
      %p258 = pneg %p146
      %p259 = pneg %p143
      %p260 = pneg %p167
      %p261 = pneg %p164
      %p262 = pneg %p193
      %p263 = pneg %p190
      %p264 = scmp.lt.s32.totalorder %s20, 2
      %s265 = scalar_select %p264, %s20, 2
      %s266 = smul.addr %s265, 8
      %s267 = scalar_lea.vmem %s7, %s266
      %p268 = scmp.lt.s32.totalorder %s20, 2
      %s269 = scalar_select %p268, %s20, 2
      %s270 = smul.addr %s269, 8
      %s271 = scalar_lea.vmem %s0, %s270
      %p272 = scmp.lt.s32.totalorder %s20, 2
      %s273 = scalar_select %p272, %s20, 2
      %s274 = smul.addr %s273, 8
      %s275 = scalar_lea.vmem %s7, %s274
      %v277 = vld [vmem:[%s271] sm:$0xff]
      %v278 = vpack.c.bf16 %v277, %v277
      %v279 = vld [vmem:[%s1] sm:$0xff]
      %v280 = vld [vmem:[%s1 + $0x8] sm:$0xff]
      %v281 = vld [vmem:[%s1 + $0x10] sm:$0xff]
      %v282 = vld [vmem:[%s1 + $0x18] sm:$0xff]
      %v283 = vld [vmem:[%s1 + $0x20] sm:$0xff]
      %v284 = vld [vmem:[%s1 + $0x28] sm:$0xff]
      %v285 = vld [vmem:[%s1 + $0x30] sm:$0xff]
      %v286 = vld [vmem:[%s1 + $0x38] sm:$0xff]
      %v287 = vld [vmem:[%s1 + $0x40] sm:$0xff]
      %v288 = vld [vmem:[%s1 + $0x48] sm:$0xff]
      %v289 = vld [vmem:[%s1 + $0x50] sm:$0xff]
      %v290 = vld [vmem:[%s1 + $0x58] sm:$0xff]
      %v291 = vld [vmem:[%s1 + $0x60] sm:$0xff]
      %v292 = vld [vmem:[%s1 + $0x68] sm:$0xff]
      %v293 = vld [vmem:[%s1 + $0x70] sm:$0xff]
      %v294 = vld [vmem:[%s1 + $0x78] sm:$0xff]
      %v295 = vld [vmem:[%s1 + $0x80] sm:$0xff]
      %v296 = vld [vmem:[%s1 + $0x88] sm:$0xff]
      %v297 = vld [vmem:[%s1 + $0x90] sm:$0xff]
      %v298 = vld [vmem:[%s1 + $0x98] sm:$0xff]
      %v299 = vld [vmem:[%s1 + $0xa0] sm:$0xff]
      %v300 = vld [vmem:[%s1 + $0xa8] sm:$0xff]
      %v301 = vld [vmem:[%s1 + $0xb0] sm:$0xff]
      %v302 = vld [vmem:[%s1 + $0xb8] sm:$0xff]
      %v303 = vld [vmem:[%s1 + $0xc0] sm:$0xff]
      %v304 = vld [vmem:[%s1 + $0xc8] sm:$0xff]
      %v305 = vld [vmem:[%s1 + $0xd0] sm:$0xff]
      %v306 = vld [vmem:[%s1 + $0xd8] sm:$0xff]
      %v307 = vld [vmem:[%s1 + $0xe0] sm:$0xff]
      %v308 = vld [vmem:[%s1 + $0xe8] sm:$0xff]
      %v309 = vld [vmem:[%s1 + $0xf0] sm:$0xff]
      %v310 = vld [vmem:[%s1 + $0xf8] sm:$0xff]
      %v311 = vld [vmem:[%s2] sm:$0xf]
      %v313 = vlaneseq
      %v314 = vshrl.u32 %v313, 7
      %v315 = vsub.s32 0, %v314
      %v316 = vrot.slane %v311, %v315
      %v317 = vlaneseq
      %v318 = vshrl.u32 %v317, 7
      %v319 = vsub.s32 1, %v318
      %v320 = vrot.slane %v311, %v319
      %v321 = vlaneseq
      %v322 = vshrl.u32 %v321, 7
      %v323 = vsub.s32 2, %v322
      %v324 = vrot.slane %v311, %v323
      %v325 = vlaneseq
      %v326 = vshrl.u32 %v325, 7
      %v327 = vsub.s32 3, %v326
      %v328 = vrot.slane %v311, %v327
      %v365 = vunpack.c.l.b16 %v279
      %v366 = vunpack.c.h.b16 %v279
      %v367 = vunpack.c.l.b16 %v280
      %v368 = vunpack.c.h.b16 %v280
      %v369 = vunpack.c.l.b16 %v281
      %v370 = vunpack.c.h.b16 %v281
      %v371 = vunpack.c.l.b16 %v282
      %v372 = vunpack.c.h.b16 %v282
      %v373 = vunpack.c.l.b16 %v283
      %v374 = vunpack.c.h.b16 %v283
      %v375 = vunpack.c.l.b16 %v284
      %v376 = vunpack.c.h.b16 %v284
      %v377 = vunpack.c.l.b16 %v285
      %v378 = vunpack.c.h.b16 %v285
      %v379 = vunpack.c.l.b16 %v286
      %v380 = vunpack.c.h.b16 %v286
      %v381 = vunpack.c.l.b16 %v287
      %v382 = vunpack.c.h.b16 %v287
      %v383 = vunpack.c.l.b16 %v288
      %v384 = vunpack.c.h.b16 %v288
      %v385 = vunpack.c.l.b16 %v289
      %v386 = vunpack.c.h.b16 %v289
      %v387 = vunpack.c.l.b16 %v290
      %v388 = vunpack.c.h.b16 %v290
      %v389 = vunpack.c.l.b16 %v291
      %v390 = vunpack.c.h.b16 %v291
      %v391 = vunpack.c.l.b16 %v292
      %v392 = vunpack.c.h.b16 %v292
      %v393 = vunpack.c.l.b16 %v293
      %v394 = vunpack.c.h.b16 %v293
      %v395 = vunpack.c.l.b16 %v294
      %v396 = vunpack.c.h.b16 %v294
      %v397 = vunpack.c.l.b16 %v295
      %v398 = vunpack.c.h.b16 %v295
      %v399 = vunpack.c.l.b16 %v296
      %v400 = vunpack.c.h.b16 %v296
      %v401 = vunpack.c.l.b16 %v297
      %v402 = vunpack.c.h.b16 %v297
      %v403 = vunpack.c.l.b16 %v298
      %v404 = vunpack.c.h.b16 %v298
      %v405 = vunpack.c.l.b16 %v299
      %v406 = vunpack.c.h.b16 %v299
      %v407 = vunpack.c.l.b16 %v300
      %v408 = vunpack.c.h.b16 %v300
      %v409 = vunpack.c.l.b16 %v301
      %v410 = vunpack.c.h.b16 %v301
      %v411 = vunpack.c.l.b16 %v302
      %v412 = vunpack.c.h.b16 %v302
      %v413 = vunpack.c.l.b16 %v303
      %v414 = vunpack.c.h.b16 %v303
      %v415 = vunpack.c.l.b16 %v304
      %v416 = vunpack.c.h.b16 %v304
      %v417 = vunpack.c.l.b16 %v305
      %v418 = vunpack.c.h.b16 %v305
      %v419 = vunpack.c.l.b16 %v306
      %v420 = vunpack.c.h.b16 %v306
      %v421 = vunpack.c.l.b16 %v307
      %v422 = vunpack.c.h.b16 %v307
      %v423 = vunpack.c.l.b16 %v308
      %v424 = vunpack.c.h.b16 %v308
      %v425 = vunpack.c.l.b16 %v309
      %v426 = vunpack.c.h.b16 %v309
      %v427 = vunpack.c.l.b16 %v310
      %v428 = vunpack.c.h.b16 %v310
      %v429 = vpack.c.b16 %v369, %v365
      %v430 = vpack.c.b16 %v370, %v366
      %v431 = vpack.c.b16 %v371, %v367
      %v432 = vpack.c.b16 %v372, %v368
      %v433 = vpack.c.b16 %v377, %v373
      %v434 = vpack.c.b16 %v378, %v374
      %v435 = vpack.c.b16 %v379, %v375
      %v436 = vpack.c.b16 %v380, %v376
      %v437 = vpack.c.b16 %v385, %v381
      %v438 = vpack.c.b16 %v386, %v382
      %v439 = vpack.c.b16 %v387, %v383
      %v440 = vpack.c.b16 %v388, %v384
      %v441 = vpack.c.b16 %v393, %v389
      %v442 = vpack.c.b16 %v394, %v390
      %v443 = vpack.c.b16 %v395, %v391
      %v444 = vpack.c.b16 %v396, %v392
      %v445 = vpack.c.b16 %v401, %v397
      %v446 = vpack.c.b16 %v402, %v398
      %v447 = vpack.c.b16 %v403, %v399
      %v448 = vpack.c.b16 %v404, %v400
      %v449 = vpack.c.b16 %v409, %v405
      %v450 = vpack.c.b16 %v410, %v406
      %v451 = vpack.c.b16 %v411, %v407
      %v452 = vpack.c.b16 %v412, %v408
      %v453 = vpack.c.b16 %v417, %v413
      %v454 = vpack.c.b16 %v418, %v414
      %v455 = vpack.c.b16 %v419, %v415
      %v456 = vpack.c.b16 %v420, %v416
      %v457 = vpack.c.b16 %v425, %v421
      %v458 = vpack.c.b16 %v426, %v422
      %v459 = vpack.c.b16 %v427, %v423
      %v460 = vpack.c.b16 %v428, %v424
      %493 = vmatprep.subr.bf16.mxu0 %v430
      %494 = vmatpush1.bf16.msra.mxu0 %v429
      %495 = vmatprep.subr.bf16.mxu0 %v434
      %496 = vmatpush1.bf16.msra.mxu0 %v433
      %497 = vmatprep.subr.bf16.mxu0 %v438
      %498 = vmatpush1.bf16.msra.mxu0 %v437
      %499 = vmatprep.subr.bf16.mxu0 %v442
      %500 = vmatpush1.bf16.msra.mxu0 %v441
      %501 = vmatprep.subr.bf16.mxu0 %v446
      %502 = vmatpush1.bf16.msra.mxu0 %v445
      %503 = vmatprep.subr.bf16.mxu0 %v450
      %504 = vmatpush1.bf16.msra.mxu0 %v449
      %505 = vmatprep.subr.bf16.mxu0 %v454
      %506 = vmatpush1.bf16.msra.mxu0 %v453
      %507 = vmatprep.subr.bf16.mxu0 %v458
      %508 = vmatpush1.bf16.msra.mxu0 %v457
      %509 = vmatprep.subr.bf16.mxu0 0
      %510 = vmatpush1.bf16.msra.mxu0 0
      %511 = vmatprep.subr.bf16.mxu0 0
      %512 = vmatpush1.bf16.msra.mxu0 0
      %513 = vmatprep.subr.bf16.mxu0 0
      %514 = vmatpush1.bf16.msra.mxu0 0
      %515 = vmatprep.subr.bf16.mxu0 0
      %516 = vmatpush1.bf16.msra.mxu0 0
      %517 = vmatprep.subr.bf16.mxu0 0
      %518 = vmatpush1.bf16.msra.mxu0 0
      %519 = vmatprep.subr.bf16.mxu0 0
      %520 = vmatpush1.bf16.msra.mxu0 0
      %521 = vmatprep.subr.bf16.mxu0 0
      %522 = vmatpush1.bf16.msra.mxu0 0
      %523 = vmatprep.subr.bf16.mxu0 0
      %524 = vmatpush1.bf16.msra.mxu0 0
      %525 = vmatprep.mubr.bf16.mxu0 0
      %526 = vmatmul.mubr.bf16.gmra.mrb[0].mxu0 %v278
      %v527 = vpop.f32.mrb[0].mxu0
      %v528 = vadd.f32 %v316, %v527
      %v529 = vpop.f32.mrb[0].mxu0
      %v530 = vadd.f32 %v320, %v529
      %v531 = vpop.f32.mrb[0].mxu0
      %v532 = vpop.f32.mrb[0].mxu0
      %533 = vdwg.mxu0
      %534 = vmatprep.subr.bf16.mxu0 %v432
      %535 = vmatpush1.bf16.msra.mxu0 %v431
      %536 = vmatprep.subr.bf16.mxu0 %v436
      %537 = vmatpush1.bf16.msra.mxu0 %v435
      %538 = vmatprep.subr.bf16.mxu0 %v440
      %539 = vmatpush1.bf16.msra.mxu0 %v439
      %540 = vmatprep.subr.bf16.mxu0 %v444
      %541 = vmatpush1.bf16.msra.mxu0 %v443
      %542 = vmatprep.subr.bf16.mxu0 %v448
      %543 = vmatpush1.bf16.msra.mxu0 %v447
      %544 = vmatprep.subr.bf16.mxu0 %v452
      %545 = vmatpush1.bf16.msra.mxu0 %v451
      %546 = vmatprep.subr.bf16.mxu0 %v456
      %547 = vmatpush1.bf16.msra.mxu0 %v455
      %548 = vmatprep.subr.bf16.mxu0 %v460
      %549 = vmatpush1.bf16.msra.mxu0 %v459
      %550 = vmatprep.subr.bf16.mxu0 0
      %551 = vmatpush1.bf16.msra.mxu0 0
      %552 = vmatprep.subr.bf16.mxu0 0
      %553 = vmatpush1.bf16.msra.mxu0 0
      %554 = vmatprep.subr.bf16.mxu0 0
      %555 = vmatpush1.bf16.msra.mxu0 0
      %556 = vmatprep.subr.bf16.mxu0 0
      %557 = vmatpush1.bf16.msra.mxu0 0
      %558 = vmatprep.subr.bf16.mxu0 0
      %559 = vmatpush1.bf16.msra.mxu0 0
      %560 = vmatprep.subr.bf16.mxu0 0
      %561 = vmatpush1.bf16.msra.mxu0 0
      %562 = vmatprep.subr.bf16.mxu0 0
      %563 = vmatpush1.bf16.msra.mxu0 0
      %564 = vmatprep.subr.bf16.mxu0 0
      %565 = vmatpush1.bf16.msra.mxu0 0
      %566 = vmatprep.mubr.bf16.mxu0 0
      %567 = vmatmul.mubr.bf16.gmra.mrb[0].mxu0 %v278
      %v568 = vpop.f32.mrb[0].mxu0
      %v569 = vadd.f32 %v324, %v568
      %v570 = vpop.f32.mrb[0].mxu0
      %v571 = vadd.f32 %v328, %v570
      %v572 = vpop.f32.mrb[0].mxu0
      %v573 = vpop.f32.mrb[0].mxu0
      %574 = vdwg.mxu0
      %v575 = vmul.f32 %v528, 0.2
      %v576 = vmul.f32 %v530, 0.2
      %v577 = vmul.f32 %v569, 0.2
      %v578 = vmul.f32 %v571, 0.2
      %v579 = vmax.f32 %v528, %v575
      %v580 = vmax.f32 %v530, %v576
      %v581 = vmax.f32 %v569, %v577
      %v582 = vmax.f32 %v571, %v578
      %v583 = vpack.c.bf16 %v579, %v579
      %v584 = vpack.c.bf16 %v580, %v580
      %v585 = vpack.c.bf16 %v581, %v581
      %v586 = vpack.c.bf16 %v582, %v582
      %v587 = vld [vmem:[%s3] sm:$0xff]
      %v588 = vld [vmem:[%s3 + $0x8] sm:$0xff]
      %v589 = vld [vmem:[%s3 + $0x10] sm:$0xff]
      %v590 = vld [vmem:[%s3 + $0x18] sm:$0xff]
      %v591 = vld [vmem:[%s3 + $0x20] sm:$0xff]
      %v592 = vld [vmem:[%s3 + $0x28] sm:$0xff]
      %v593 = vld [vmem:[%s3 + $0x30] sm:$0xff]
      %v594 = vld [vmem:[%s3 + $0x38] sm:$0xff]
      %v595 = vld [vmem:[%s3 + $0x40] sm:$0xff]
      %v596 = vld [vmem:[%s3 + $0x48] sm:$0xff]
      %v597 = vld [vmem:[%s3 + $0x50] sm:$0xff]
      %v598 = vld [vmem:[%s3 + $0x58] sm:$0xff]
      %v599 = vld [vmem:[%s3 + $0x60] sm:$0xff]
      %v600 = vld [vmem:[%s3 + $0x68] sm:$0xff]
      %v601 = vld [vmem:[%s3 + $0x70] sm:$0xff]
      %v602 = vld [vmem:[%s3 + $0x78] sm:$0xff]
      %v603 = vld [vmem:[%s3 + $0x80] sm:$0xff]
      %v604 = vld [vmem:[%s3 + $0x88] sm:$0xff]
      %v605 = vld [vmem:[%s3 + $0x90] sm:$0xff]
      %v606 = vld [vmem:[%s3 + $0x98] sm:$0xff]
      %v607 = vld [vmem:[%s3 + $0xa0] sm:$0xff]
      %v608 = vld [vmem:[%s3 + $0xa8] sm:$0xff]
      %v609 = vld [vmem:[%s3 + $0xb0] sm:$0xff]
      %v610 = vld [vmem:[%s3 + $0xb8] sm:$0xff]
      %v611 = vld [vmem:[%s3 + $0xc0] sm:$0xff]
      %v612 = vld [vmem:[%s3 + $0xc8] sm:$0xff]
      %v613 = vld [vmem:[%s3 + $0xd0] sm:$0xff]
      %v614 = vld [vmem:[%s3 + $0xd8] sm:$0xff]
      %v615 = vld [vmem:[%s3 + $0xe0] sm:$0xff]
      %v616 = vld [vmem:[%s3 + $0xe8] sm:$0xff]
      %v617 = vld [vmem:[%s3 + $0xf0] sm:$0xff]
      %v618 = vld [vmem:[%s3 + $0xf8] sm:$0xff]
      %v619 = vld [vmem:[%s3 + $0x100] sm:$0xff]
      %v620 = vld [vmem:[%s3 + $0x108] sm:$0xff]
      %v621 = vld [vmem:[%s3 + $0x110] sm:$0xff]
      %v622 = vld [vmem:[%s3 + $0x118] sm:$0xff]
      %v623 = vld [vmem:[%s3 + $0x120] sm:$0xff]
      %v624 = vld [vmem:[%s3 + $0x128] sm:$0xff]
      %v625 = vld [vmem:[%s3 + $0x130] sm:$0xff]
      %v626 = vld [vmem:[%s3 + $0x138] sm:$0xff]
      %v627 = vld [vmem:[%s3 + $0x140] sm:$0xff]
      %v628 = vld [vmem:[%s3 + $0x148] sm:$0xff]
      %v629 = vld [vmem:[%s3 + $0x150] sm:$0xff]
      %v630 = vld [vmem:[%s3 + $0x158] sm:$0xff]
      %v631 = vld [vmem:[%s3 + $0x160] sm:$0xff]
      %v632 = vld [vmem:[%s3 + $0x168] sm:$0xff]
      %v633 = vld [vmem:[%s3 + $0x170] sm:$0xff]
      %v634 = vld [vmem:[%s3 + $0x178] sm:$0xff]
      %v635 = vld [vmem:[%s3 + $0x180] sm:$0xff]
      %v636 = vld [vmem:[%s3 + $0x188] sm:$0xff]
      %v637 = vld [vmem:[%s3 + $0x190] sm:$0xff]
      %v638 = vld [vmem:[%s3 + $0x198] sm:$0xff]
      %v639 = vld [vmem:[%s3 + $0x1a0] sm:$0xff]
      %v640 = vld [vmem:[%s3 + $0x1a8] sm:$0xff]
      %v641 = vld [vmem:[%s3 + $0x1b0] sm:$0xff]
      %v642 = vld [vmem:[%s3 + $0x1b8] sm:$0xff]
      %v643 = vld [vmem:[%s3 + $0x1c0] sm:$0xff]
      %v644 = vld [vmem:[%s3 + $0x1c8] sm:$0xff]
      %v645 = vld [vmem:[%s3 + $0x1d0] sm:$0xff]
      %v646 = vld [vmem:[%s3 + $0x1d8] sm:$0xff]
      %v647 = vld [vmem:[%s3 + $0x1e0] sm:$0xff]
      %v648 = vld [vmem:[%s3 + $0x1e8] sm:$0xff]
      %v649 = vld [vmem:[%s3 + $0x1f0] sm:$0xff]
      %v650 = vld [vmem:[%s3 + $0x1f8] sm:$0xff]
      %v651 = vld [vmem:[%s4] sm:$0x3]
      %v653 = vlaneseq
      %v654 = vshrl.u32 %v653, 7
      %v655 = vsub.s32 0, %v654
      %v656 = vrot.slane %v651, %v655
      %v657 = vlaneseq
      %v658 = vshrl.u32 %v657, 7
      %v659 = vsub.s32 1, %v658
      %v660 = vrot.slane %v651, %v659
      %v727 = vunpack.c.l.b16 %v587
      %v728 = vunpack.c.h.b16 %v587
      %v729 = vunpack.c.l.b16 %v588
      %v730 = vunpack.c.h.b16 %v588
      %v731 = vunpack.c.l.b16 %v589
      %v732 = vunpack.c.h.b16 %v589
      %v733 = vunpack.c.l.b16 %v590
      %v734 = vunpack.c.h.b16 %v590
      %v735 = vunpack.c.l.b16 %v591
      %v736 = vunpack.c.h.b16 %v591
      %v737 = vunpack.c.l.b16 %v592
      %v738 = vunpack.c.h.b16 %v592
      %v739 = vunpack.c.l.b16 %v593
      %v740 = vunpack.c.h.b16 %v593
      %v741 = vunpack.c.l.b16 %v594
      %v742 = vunpack.c.h.b16 %v594
      %v743 = vunpack.c.l.b16 %v595
      %v744 = vunpack.c.h.b16 %v595
      %v745 = vunpack.c.l.b16 %v596
      %v746 = vunpack.c.h.b16 %v596
      %v747 = vunpack.c.l.b16 %v597
      %v748 = vunpack.c.h.b16 %v597
      %v749 = vunpack.c.l.b16 %v598
      %v750 = vunpack.c.h.b16 %v598
      %v751 = vunpack.c.l.b16 %v599
      %v752 = vunpack.c.h.b16 %v599
      %v753 = vunpack.c.l.b16 %v600
      %v754 = vunpack.c.h.b16 %v600
      %v755 = vunpack.c.l.b16 %v601
      %v756 = vunpack.c.h.b16 %v601
      %v757 = vunpack.c.l.b16 %v602
      %v758 = vunpack.c.h.b16 %v602
      %v759 = vunpack.c.l.b16 %v603
      %v760 = vunpack.c.h.b16 %v603
      %v761 = vunpack.c.l.b16 %v604
      %v762 = vunpack.c.h.b16 %v604
      %v763 = vunpack.c.l.b16 %v605
      %v764 = vunpack.c.h.b16 %v605
      %v765 = vunpack.c.l.b16 %v606
      %v766 = vunpack.c.h.b16 %v606
      %v767 = vunpack.c.l.b16 %v607
      %v768 = vunpack.c.h.b16 %v607
      %v769 = vunpack.c.l.b16 %v608
      %v770 = vunpack.c.h.b16 %v608
      %v771 = vunpack.c.l.b16 %v609
      %v772 = vunpack.c.h.b16 %v609
      %v773 = vunpack.c.l.b16 %v610
      %v774 = vunpack.c.h.b16 %v610
      %v775 = vunpack.c.l.b16 %v611
      %v776 = vunpack.c.h.b16 %v611
      %v777 = vunpack.c.l.b16 %v612
      %v778 = vunpack.c.h.b16 %v612
      %v779 = vunpack.c.l.b16 %v613
      %v780 = vunpack.c.h.b16 %v613
      %v781 = vunpack.c.l.b16 %v614
      %v782 = vunpack.c.h.b16 %v614
      %v783 = vunpack.c.l.b16 %v615
      %v784 = vunpack.c.h.b16 %v615
      %v785 = vunpack.c.l.b16 %v616
      %v786 = vunpack.c.h.b16 %v616
      %v787 = vunpack.c.l.b16 %v617
      %v788 = vunpack.c.h.b16 %v617
      %v789 = vunpack.c.l.b16 %v618
      %v790 = vunpack.c.h.b16 %v618
      %v791 = vunpack.c.l.b16 %v619
      %v792 = vunpack.c.h.b16 %v619
      %v793 = vunpack.c.l.b16 %v620
      %v794 = vunpack.c.h.b16 %v620
      %v795 = vunpack.c.l.b16 %v621
      %v796 = vunpack.c.h.b16 %v621
      %v797 = vunpack.c.l.b16 %v622
      %v798 = vunpack.c.h.b16 %v622
      %v799 = vunpack.c.l.b16 %v623
      %v800 = vunpack.c.h.b16 %v623
      %v801 = vunpack.c.l.b16 %v624
      %v802 = vunpack.c.h.b16 %v624
      %v803 = vunpack.c.l.b16 %v625
      %v804 = vunpack.c.h.b16 %v625
      %v805 = vunpack.c.l.b16 %v626
      %v806 = vunpack.c.h.b16 %v626
      %v807 = vunpack.c.l.b16 %v627
      %v808 = vunpack.c.h.b16 %v627
      %v809 = vunpack.c.l.b16 %v628
      %v810 = vunpack.c.h.b16 %v628
      %v811 = vunpack.c.l.b16 %v629
      %v812 = vunpack.c.h.b16 %v629
      %v813 = vunpack.c.l.b16 %v630
      %v814 = vunpack.c.h.b16 %v630
      %v815 = vunpack.c.l.b16 %v631
      %v816 = vunpack.c.h.b16 %v631
      %v817 = vunpack.c.l.b16 %v632
      %v818 = vunpack.c.h.b16 %v632
      %v819 = vunpack.c.l.b16 %v633
      %v820 = vunpack.c.h.b16 %v633
      %v821 = vunpack.c.l.b16 %v634
      %v822 = vunpack.c.h.b16 %v634
      %v823 = vunpack.c.l.b16 %v635
      %v824 = vunpack.c.h.b16 %v635
      %v825 = vunpack.c.l.b16 %v636
      %v826 = vunpack.c.h.b16 %v636
      %v827 = vunpack.c.l.b16 %v637
      %v828 = vunpack.c.h.b16 %v637
      %v829 = vunpack.c.l.b16 %v638
      %v830 = vunpack.c.h.b16 %v638
      %v831 = vunpack.c.l.b16 %v639
      %v832 = vunpack.c.h.b16 %v639
      %v833 = vunpack.c.l.b16 %v640
      %v834 = vunpack.c.h.b16 %v640
      %v835 = vunpack.c.l.b16 %v641
      %v836 = vunpack.c.h.b16 %v641
      %v837 = vunpack.c.l.b16 %v642
      %v838 = vunpack.c.h.b16 %v642
      %v839 = vunpack.c.l.b16 %v643
      %v840 = vunpack.c.h.b16 %v643
      %v841 = vunpack.c.l.b16 %v644
      %v842 = vunpack.c.h.b16 %v644
      %v843 = vunpack.c.l.b16 %v645
      %v844 = vunpack.c.h.b16 %v645
      %v845 = vunpack.c.l.b16 %v646
      %v846 = vunpack.c.h.b16 %v646
      %v847 = vunpack.c.l.b16 %v647
      %v848 = vunpack.c.h.b16 %v647
      %v849 = vunpack.c.l.b16 %v648
      %v850 = vunpack.c.h.b16 %v648
      %v851 = vunpack.c.l.b16 %v649
      %v852 = vunpack.c.h.b16 %v649
      %v853 = vunpack.c.l.b16 %v650
      %v854 = vunpack.c.h.b16 %v650
      %v855 = vpack.c.b16 %v729, %v727
      %v856 = vpack.c.b16 %v730, %v728
      %v857 = vpack.c.b16 %v733, %v731
      %v858 = vpack.c.b16 %v734, %v732
      %v859 = vpack.c.b16 %v737, %v735
      %v860 = vpack.c.b16 %v738, %v736
      %v861 = vpack.c.b16 %v741, %v739
      %v862 = vpack.c.b16 %v742, %v740
      %v863 = vpack.c.b16 %v745, %v743
      %v864 = vpack.c.b16 %v746, %v744
      %v865 = vpack.c.b16 %v749, %v747
      %v866 = vpack.c.b16 %v750, %v748
      %v867 = vpack.c.b16 %v753, %v751
      %v868 = vpack.c.b16 %v754, %v752
      %v869 = vpack.c.b16 %v757, %v755
      %v870 = vpack.c.b16 %v758, %v756
      %v871 = vpack.c.b16 %v761, %v759
      %v872 = vpack.c.b16 %v762, %v760
      %v873 = vpack.c.b16 %v765, %v763
      %v874 = vpack.c.b16 %v766, %v764
      %v875 = vpack.c.b16 %v769, %v767
      %v876 = vpack.c.b16 %v770, %v768
      %v877 = vpack.c.b16 %v773, %v771
      %v878 = vpack.c.b16 %v774, %v772
      %v879 = vpack.c.b16 %v777, %v775
      %v880 = vpack.c.b16 %v778, %v776
      %v881 = vpack.c.b16 %v781, %v779
      %v882 = vpack.c.b16 %v782, %v780
      %v883 = vpack.c.b16 %v785, %v783
      %v884 = vpack.c.b16 %v786, %v784
      %v885 = vpack.c.b16 %v789, %v787
      %v886 = vpack.c.b16 %v790, %v788
      %v887 = vpack.c.b16 %v793, %v791
      %v888 = vpack.c.b16 %v794, %v792
      %v889 = vpack.c.b16 %v797, %v795
      %v890 = vpack.c.b16 %v798, %v796
      %v891 = vpack.c.b16 %v801, %v799
      %v892 = vpack.c.b16 %v802, %v800
      %v893 = vpack.c.b16 %v805, %v803
      %v894 = vpack.c.b16 %v806, %v804
      %v895 = vpack.c.b16 %v809, %v807
      %v896 = vpack.c.b16 %v810, %v808
      %v897 = vpack.c.b16 %v813, %v811
      %v898 = vpack.c.b16 %v814, %v812
      %v899 = vpack.c.b16 %v817, %v815
      %v900 = vpack.c.b16 %v818, %v816
      %v901 = vpack.c.b16 %v821, %v819
      %v902 = vpack.c.b16 %v822, %v820
      %v903 = vpack.c.b16 %v825, %v823
      %v904 = vpack.c.b16 %v826, %v824
      %v905 = vpack.c.b16 %v829, %v827
      %v906 = vpack.c.b16 %v830, %v828
      %v907 = vpack.c.b16 %v833, %v831
      %v908 = vpack.c.b16 %v834, %v832
      %v909 = vpack.c.b16 %v837, %v835
      %v910 = vpack.c.b16 %v838, %v836
      %v911 = vpack.c.b16 %v841, %v839
      %v912 = vpack.c.b16 %v842, %v840
      %v913 = vpack.c.b16 %v845, %v843
      %v914 = vpack.c.b16 %v846, %v844
      %v915 = vpack.c.b16 %v849, %v847
      %v916 = vpack.c.b16 %v850, %v848
      %v917 = vpack.c.b16 %v853, %v851
      %v918 = vpack.c.b16 %v854, %v852
      %983 = vmatprep.subr.bf16.mxu0 %v856
      %984 = vmatpush1.bf16.msra.mxu0 %v855
      %985 = vmatprep.subr.bf16.mxu0 %v858
      %986 = vmatpush1.bf16.msra.mxu0 %v857
      %987 = vmatprep.subr.bf16.mxu0 %v860
      %988 = vmatpush1.bf16.msra.mxu0 %v859
      %989 = vmatprep.subr.bf16.mxu0 %v862
      %990 = vmatpush1.bf16.msra.mxu0 %v861
      %991 = vmatprep.subr.bf16.mxu0 %v864
      %992 = vmatpush1.bf16.msra.mxu0 %v863
      %993 = vmatprep.subr.bf16.mxu0 %v866
      %994 = vmatpush1.bf16.msra.mxu0 %v865
      %995 = vmatprep.subr.bf16.mxu0 %v868
      %996 = vmatpush1.bf16.msra.mxu0 %v867
      %997 = vmatprep.subr.bf16.mxu0 %v870
      %998 = vmatpush1.bf16.msra.mxu0 %v869
      %999 = vmatprep.subr.bf16.mxu0 %v872
      %1000 = vmatpush1.bf16.msra.mxu0 %v871
      %1001 = vmatprep.subr.bf16.mxu0 %v874
      %1002 = vmatpush1.bf16.msra.mxu0 %v873
      %1003 = vmatprep.subr.bf16.mxu0 %v876
      %1004 = vmatpush1.bf16.msra.mxu0 %v875
      %1005 = vmatprep.subr.bf16.mxu0 %v878
      %1006 = vmatpush1.bf16.msra.mxu0 %v877
      %1007 = vmatprep.subr.bf16.mxu0 %v880
      %1008 = vmatpush1.bf16.msra.mxu0 %v879
      %1009 = vmatprep.subr.bf16.mxu0 %v882
      %1010 = vmatpush1.bf16.msra.mxu0 %v881
      %1011 = vmatprep.subr.bf16.mxu0 %v884
      %1012 = vmatpush1.bf16.msra.mxu0 %v883
      %1013 = vmatprep.subr.bf16.mxu0 %v886
      %1014 = vmatpush1.bf16.msra.mxu0 %v885
      %1015 = vmatprep.mubr.bf16.mxu0 %v584
      %1016 = vmatmul.mubr.bf16.gmra.mrb[0].mxu0 %v583
      %v1017 = vpop.f32.mrb[0].mxu0
      %v1018 = vadd.f32 %v656, %v1017
      %v1019 = vpop.f32.mrb[0].mxu0
      %v1020 = vadd.f32 %v660, %v1019
      %v1021 = vpop.f32.mrb[0].mxu0
      %v1022 = vpop.f32.mrb[0].mxu0
      %1023 = vdwg.mxu0
      %1024 = vmatprep.subr.bf16.mxu0 %v888
      %1025 = vmatpush1.bf16.msra.mxu0 %v887
      %1026 = vmatprep.subr.bf16.mxu0 %v890
      %1027 = vmatpush1.bf16.msra.mxu0 %v889
      %1028 = vmatprep.subr.bf16.mxu0 %v892
      %1029 = vmatpush1.bf16.msra.mxu0 %v891
      %1030 = vmatprep.subr.bf16.mxu0 %v894
      %1031 = vmatpush1.bf16.msra.mxu0 %v893
      %1032 = vmatprep.subr.bf16.mxu0 %v896
      %1033 = vmatpush1.bf16.msra.mxu0 %v895
      %1034 = vmatprep.subr.bf16.mxu0 %v898
      %1035 = vmatpush1.bf16.msra.mxu0 %v897
      %1036 = vmatprep.subr.bf16.mxu0 %v900
      %1037 = vmatpush1.bf16.msra.mxu0 %v899
      %1038 = vmatprep.subr.bf16.mxu0 %v902
      %1039 = vmatpush1.bf16.msra.mxu0 %v901
      %1040 = vmatprep.subr.bf16.mxu0 %v904
      %1041 = vmatpush1.bf16.msra.mxu0 %v903
      %1042 = vmatprep.subr.bf16.mxu0 %v906
      %1043 = vmatpush1.bf16.msra.mxu0 %v905
      %1044 = vmatprep.subr.bf16.mxu0 %v908
      %1045 = vmatpush1.bf16.msra.mxu0 %v907
      %1046 = vmatprep.subr.bf16.mxu0 %v910
      %1047 = vmatpush1.bf16.msra.mxu0 %v909
      %1048 = vmatprep.subr.bf16.mxu0 %v912
      %1049 = vmatpush1.bf16.msra.mxu0 %v911
      %1050 = vmatprep.subr.bf16.mxu0 %v914
      %1051 = vmatpush1.bf16.msra.mxu0 %v913
      %1052 = vmatprep.subr.bf16.mxu0 %v916
      %1053 = vmatpush1.bf16.msra.mxu0 %v915
      %1054 = vmatprep.subr.bf16.mxu0 %v918
      %1055 = vmatpush1.bf16.msra.mxu0 %v917
      %1056 = vmatprep.mubr.bf16.mxu0 %v586
      %1057 = vmatmul.mubr.bf16.gmra.mrb[0].mxu0 %v585
      %v1058 = vpop.f32.mrb[0].mxu0
      %v1059 = vadd.f32 %v1018, %v1058
      %v1060 = vpop.f32.mrb[0].mxu0
      %v1061 = vadd.f32 %v1020, %v1060
      %v1062 = vpop.f32.mrb[0].mxu0
      %v1063 = vpop.f32.mrb[0].mxu0
      %1064 = vdwg.mxu0
      %v1065 = vmul.f32 %v1059, 0.2
      %v1066 = vmul.f32 %v1061, 0.2
      %v1067 = vmax.f32 %v1059, %v1065
      %v1068 = vmax.f32 %v1061, %v1066
      %v1069 = vld [vmem:[%s5] sm:$0x3]
      %v1071 = vlaneseq
      %v1072 = vshrl.u32 %v1071, 7
      %v1073 = vsub.s32 0, %v1072
      %v1074 = vrot.slane %v1069, %v1073
      %v1075 = vlaneseq
      %v1076 = vshrl.u32 %v1075, 7
      %v1077 = vsub.s32 1, %v1076
      %v1078 = vrot.slane %v1069, %v1077
      %v1081 = vmul.f32 %v1067, %v1074
      %v1082 = vmul.f32 %v1068, %v1078
      %v1083 = vadd.f32 %v1081, %v1082
      %1084 = vadd.xlane.f32.xlu0 %v1083
      %v1085 = vpop.xlane.xlu0 %1084
      %v1086 = vld [vmem:[#allocation2] sm:$0x1]
      %v1088 = vlaneseq
      %v1089 = vshrl.u32 %v1088, 7
      %v1090 = vsub.s32 0, %v1089
      %v1091 = vrot.slane %v1086, %v1090
      %v1093 = vadd.f32 %v1085, %v1091
      %v1094 = vsub.f32 0.0, %v1093
      %v1095 = vmul.f32 %v1094, 1.442695
      %v1096 = vpow.pop %v1095
      %v1097 = vadd.f32 %v1096, 1.0
      %v1098 = vrcp.pop %v1097
      %v1099 = vmul.f32 1.0, %v1098
      %vm1100 = vcmask 7168
      %1101 = vst.msk [vmem:[%s275] sm:$0xff] %vm1100, %v1099
      %p1102 = scmp.lt.s32.totalorder %s20, 2
      %s1103 = scalar_select %p1102, %s20, 2
      %s1104 = smul.addr %s1103, 8
      %s1105 = scalar_lea.vmem %s7, %s1104
      // Predicated region
      $region49: #{discriminator_forward.1} parent=47 // pred_check
        %p1106 = pneg %p190
      $region50: #{discriminator_forward.1} parent=47 // pred_check_branch
        %1108 = sbr.rel (%p1106) target = $region52
      $region51: #{discriminator_forward.1} parent=47 // pred_region
        _
      $region52: #{discriminator_forward.1} parent=47 // pred_fallthru
        _
    $region48: #{discriminator_forward.1} parent=5 // pred_fallthru
      _
    %p1109 = scmp.le.s32.totalorder 2, %s15
    // Predicated region
    $region53: #{discriminator_forward.1} parent=5 // pred_check
      %p1110 = pneg %p1109
    $region54: #{discriminator_forward.1} parent=5 // pred_check_branch
      %1112 = sbr.rel (%p1110) target = $region56
    $region55: #{discriminator_forward.1} parent=5 // pred_region
      %s1113 = ssub.s32 %s15, 2
      // Predicated region
      $region57: #{discriminator_forward.1} parent=55 // pred_check
        %p1114 = pneg %p196
      $region58: #{discriminator_forward.1} parent=55 // pred_check_branch
        %1116 = sbr.rel (%p1114) target = $region60
      $region59: #{discriminator_forward.1} parent=55 // pred_region
        %p1117 = scmp.lt.s32.totalorder %s21, 2
        %s1118 = scalar_select %p1117, %s21, 2
        %s1119 = smul.addr %s1118, 8
        %s1120 = scalar_lea.vmem %s7, %s1119
      $region60: #{discriminator_forward.1} parent=55 // pred_fallthru
        _
    $region56: #{discriminator_forward.1} parent=5 // pred_fallthru
      _
  $region6: #{discriminator_forward.1} parent=0 // loop_footer
    %s19 = sadd.s32 1, %s15
  $region7: #{discriminator_forward.1} parent=0 // loop_footer_branch
    %14 = sbr.rel target = $region3
  $region8: #{discriminator_forward.1} parent=0 // loop_exit
    _

</llo_original>
